<compile_context>
chip_gen: v7x
topology: tpu7x:2x2x1
jax: 0.10.0
libtpu: 0.0.40
codegen_flags: <defaults>
</compile_context>

<pallas_src>
import functools

import jax
import jax.numpy as jnp
from jax.experimental import pallas as pl
from jax.experimental.pallas import tpu as pltpu


def _round_up(x, m):
    return ((x + m - 1) // m) * m


def attn_decoder_kernel(vecs_ref, enc_ref, wcomb_ref, wgru_ref, wout_ref,
                        logp_ref, hnew_ref, aw_ref, *, H):
    """One AttnDecoderRNN.forward step.

    vecs_ref : (8, W)  f32 packed small operands:
               row0 embedded token [:H], row1 hidden [:H],
               row2 attn weight (hidden half) [:H] + attn bias at lane H,
               row3 attn weight (encoder half) [:H],
               row4 attn_combine bias [:H],
               row5 out bias [:Vp] (padded lanes = -1e30 log-softmax mask),
               row6 folded GRU biases [:4*GB].
    enc_ref  : (Lp, H)       f32 encoder outputs (padded rows zero)
    wcomb_ref: (2H, H)       attn_combine^T stacked [emb-half ; ctx-half]
    wgru_ref : (2H, 4*GB)    GRU weights, blocks [r | z | n_in | n_hid]
    wout_ref : (H, Vp)       out^T (padded cols zero)
    outputs  : logp (1, Vp), new hidden (1, GB), attn weights column (Lp, 1)
    """
    f32 = jnp.float32
    GB = hnew_ref.shape[1]
    Vp = logp_ref.shape[1]

    emb  = vecs_ref[0:1, 0:H]                 # (1, H)
    hid  = vecs_ref[1:2, 0:GB]                # (1, GB), lanes >= H are zero
    hid_h = hid[:, 0:H]                       # (1, H)
    wah  = vecs_ref[2:3, 0:H]                 # (1, H)
    ab   = vecs_ref[2:3, H:H + 1]             # (1, 1) attn bias
    wae  = vecs_ref[3:4, 0:H]                 # (1, H)
    bc   = vecs_ref[4:5, 0:H]                 # (1, H)
    bout = vecs_ref[5:6, 0:Vp]                # (1, Vp)
    bgru = vecs_ref[6:7, 0:4 * GB]            # (1, 4*GB)

    enc = enc_ref[...]                        # (Lp, H) f32

    # ---- attention scores; softmax over a singleton axis -> all ones --------
    # (computed literally so NaN/inf propagation matches F.softmax(..., dim=1))
    s_hid = jnp.sum(hid_h * wah, axis=1, keepdims=True) + ab       # (1, 1)
    s = jnp.sum(enc * wae, axis=1, keepdims=True) + s_hid          # (Lp, 1)
    aw = jnp.exp(s - s)                                            # (Lp, 1)
    aw_ref[...] = aw
    # c = attn_weights.T @ encoder_outputs  (padded enc rows are zero)
    c = jnp.sum(aw * enc, axis=0, keepdims=True)                   # (1, H)

    # ---- attn_combine: ONE dot over cat(embedded, context) ------------------
    x = jnp.concatenate([emb, c], axis=1)                          # (1, 2H)
    ic = jnp.dot(x, wcomb_ref[...].astype(f32),
                 preferred_element_type=f32) + bc                  # (1, H)

    # ---- GRU step: ONE dot over cat(input_combine, hidden) ------------------
    lhs = jnp.concatenate([ic, hid_h], axis=1)                     # (1, 2H)
    g = jnp.dot(lhs, wgru_ref[...].astype(f32),
                preferred_element_type=f32) + bgru                 # (1, 4*GB)
    r = jax.nn.sigmoid(g[:, 0:GB])
    z = jax.nn.sigmoid(g[:, GB:2 * GB])
    n = jnp.tanh(g[:, 2 * GB:3 * GB] + r * g[:, 3 * GB:4 * GB])
    h_new = n + z * (hid - n)                 # == (1 - z) * n + z * h
    hnew_ref[...] = h_new

    # ---- output projection + log_softmax ------------------------------------
    logits = jnp.dot(h_new[:, 0:H], wout_ref[...].astype(f32),
                     preferred_element_type=f32) + bout            # (1, Vp)
    m = jnp.max(logits, axis=1, keepdims=True)
    sh = logits - m
    lse = jnp.log(jnp.sum(jnp.exp(sh), axis=1, keepdims=True))
    logp_ref[...] = sh - lse


def init_attn_decoder_params(emb_table, w_attn, b_attn, w_combine, b_combine,
                             w_ih, w_hh, b_ih, b_hh, w_out, b_out,
                             weight_dtype=jnp.bfloat16):
    """One-time weight preprocessing (transpose / stack / fold / mask / cast)."""
    f32 = jnp.float32
    V, H = emb_table.shape
    GB = _round_up(H, 128)           # gate lane-block pitch (vreg-aligned)
    Vp = _round_up(V, 128)
    W = max(4 * GB, Vp)              # lane width of the packed operand slab

    def T(x):
        return x.astype(f32).T

    # attn_combine^T stacked so one dot consumes cat(embedded, c).
    wcomb = jnp.concatenate([T(w_combine[:, :H]), T(w_combine[:, H:])], axis=0)

    # GRU weights as ONE (2H, 4*GB) matrix, blocks [r | z | n_input | n_hidden].
    wgru = jnp.zeros((2 * H, 4 * GB), f32)
    for gate in range(2):            # r, z : input + hidden contributions fused
        wgru = wgru.at[0:H,      gate * GB:gate * GB + H].set(T(w_ih[gate * H:(gate + 1) * H]))
        wgru = wgru.at[H:2 * H,  gate * GB:gate * GB + H].set(T(w_hh[gate * H:(gate + 1) * H]))
    wgru = wgru.at[0:H,     2 * GB:2 * GB + H].set(T(w_ih[2 * H:3 * H]))   # n, input only
    wgru = wgru.at[H:2 * H, 3 * GB:3 * GB + H].set(T(w_hh[2 * H:3 * H]))   # n, hidden only

    wout = jnp.zeros((H, Vp), f32).at[:, :V].set(T(w_out))

    # Packed small operands (biases stay f32; rows 0/1 are per-step activation slots).
    vecs = jnp.zeros((8, W), f32)
    vecs = vecs.at[2, :H].set(w_attn[0, :H].astype(f32))
    vecs = vecs.at[2, H].set(b_attn.reshape(())[()].astype(f32))
    vecs = vecs.at[3, :H].set(w_attn[0, H:2 * H].astype(f32))
    vecs = vecs.at[4, :H].set(b_combine.astype(f32))
    vecs = vecs.at[5, :Vp].set(jnp.full((Vp,), -1e30, f32))
    vecs = vecs.at[5, :V].set(b_out.astype(f32))
    bgru = jnp.zeros((4 * GB,), f32)
    bgru = bgru.at[0 * GB:0 * GB + H].set((b_ih[0:H] + b_hh[0:H]).astype(f32))
    bgru = bgru.at[1 * GB:1 * GB + H].set((b_ih[H:2 * H] + b_hh[H:2 * H]).astype(f32))
    bgru = bgru.at[2 * GB:2 * GB + H].set(b_ih[2 * H:3 * H].astype(f32))
    bgru = bgru.at[3 * GB:3 * GB + H].set(b_hh[2 * H:3 * H].astype(f32))
    vecs = vecs.at[6, :4 * GB].set(bgru)

    return dict(
        emb=emb_table.astype(f32),
        vecs=vecs,
        wcomb=wcomb.astype(weight_dtype),
        wgru=wgru.astype(weight_dtype),
        wout=wout.astype(weight_dtype),
    )


@jax.jit
def attn_decoder_step(params, token, hidden, encoder_outputs):
    """One decoder step. Returns (log_probs (1,V), hidden (1,1,H), attn (L,1))."""
    f32 = jnp.float32
    V, H = params["emb"].shape
    GB = params["wgru"].shape[1] // 4
    Vp = params["wout"].shape[1]
    L = encoder_outputs.shape[0]
    Lp = _round_up(L, 8)

    # Embedding lookup (dropout == identity in eval mode).
    emb_row = params["emb"][token]                                  # (H,)
    hid_row = hidden.reshape(-1)[:H].astype(f32)                    # (H,)
    vecs = (params["vecs"]
            .at[0, :H].set(emb_row)
            .at[1, :H].set(hid_row))
    enc = jnp.pad(encoder_outputs.astype(f32), ((0, Lp - L), (0, 0)))

    vmem = pl.BlockSpec(memory_space=pltpu.MemorySpace.VMEM)
    logp, h_new, aw = pl.pallas_call(
        functools.partial(attn_decoder_kernel, H=H),
        out_shape=(jax.ShapeDtypeStruct((1, Vp), f32),
                   jax.ShapeDtypeStruct((1, GB), f32),
                   jax.ShapeDtypeStruct((Lp, 1), f32)),
        in_specs=[vmem] * 5,
        out_specs=(vmem, vmem, vmem),
    )(vecs, enc, params["wcomb"], params["wgru"], params["wout"])

    output = logp[:, :V]                                            # (1, V)
    hidden_out = h_new[:, :H].reshape(1, 1, H)                      # (1, 1, H)
    attn_weights = aw[:L, :]                                        # (L, 1)
    return output, hidden_out, attn_weights


def _reference_forward(token, hidden, encoder_outputs,
                       emb_table, w_attn, b_attn,
                       w_combine, b_combine,
                       w_ih, w_hh, b_ih, b_hh,
                       w_out, b_out):
    """Plain-JAX reference implementing the same math as the PyTorch module."""
    H = emb_table.shape[1]
    L = encoder_outputs.shape[0]
    embedded = emb_table[token][None, :]                            # (1, H)
    hid = hidden.reshape(1, H)
    hidden_expand = jnp.broadcast_to(hid, (L, H))
    combo = jnp.concatenate([hidden_expand, encoder_outputs], axis=1)   # (L, 2H)
    scores = combo @ w_attn.T + b_attn                              # (L, 1)
    attn_weights = jax.nn.softmax(scores, axis=1)                   # (L, 1) -> ones
    c = attn_weights.T @ encoder_outputs                            # (1, H)
    input_t = jnp.concatenate([embedded, c], axis=1)                # (1, 2H)
    ic = input_t @ w_combine.T + b_combine                          # (1, H)
    gi = ic @ w_ih.T + b_ih
    gh = hid @ w_hh.T + b_hh
    i_r, i_z, i_n = gi[:, :H], gi[:, H:2 * H], gi[:, 2 * H:]
    h_r, h_z, h_n = gh[:, :H], gh[:, H:2 * H], gh[:, 2 * H:]
    r = jax.nn.sigmoid(i_r + h_r)
    z = jax.nn.sigmoid(i_z + h_z)
    n = jnp.tanh(i_n + r * h_n)
    h_new = (1.0 - z) * n + z * hid
    logits = h_new @ w_out.T + b_out
    logp = jax.nn.log_softmax(logits, axis=1)
    return logp, h_new.reshape(1, 1, H), attn_weights


if __name__ == "__main__":
    # Small, deterministic configuration.
    hidden_size = 32          # H
    output_size = 20          # V (vocab)
    max_length = 10           # L

    key = jax.random.PRNGKey(0)
    (k_emb, k_wa, k_ba, k_wc, k_bc, k_wih, k_whh,
     k_bih, k_bhh, k_wo, k_bo, k_enc, k_tok) = jax.random.split(key, 13)

    H, V, L = hidden_size, output_size, max_length
    bound_attn = 1.0 / jnp.sqrt(2.0 * H)
    bound_h = 1.0 / jnp.sqrt(1.0 * H)

    emb_table = jax.random.normal(k_emb, (V, H), jnp.float32)
    w_attn = jax.random.uniform(k_wa, (1, 2 * H), jnp.float32, -bound_attn, bound_attn)
    b_attn = jax.random.uniform(k_ba, (1,), jnp.float32, -bound_attn, bound_attn)
    w_combine = jax.random.uniform(k_wc, (H, 2 * H), jnp.float32, -bound_attn, bound_attn)
    b_combine = jax.random.uniform(k_bc, (H,), jnp.float32, -bound_attn, bound_attn)
    w_ih = jax.random.uniform(k_wih, (3 * H, H), jnp.float32, -bound_h, bound_h)
    w_hh = jax.random.uniform(k_whh, (3 * H, H), jnp.float32, -bound_h, bound_h)
    b_ih = jax.random.uniform(k_bih, (3 * H,), jnp.float32, -bound_h, bound_h)
    b_hh = jax.random.uniform(k_bhh, (3 * H,), jnp.float32, -bound_h, bound_h)
    w_out = jax.random.uniform(k_wo, (V, H), jnp.float32, -bound_h, bound_h)
    b_out = jax.random.uniform(k_bo, (V,), jnp.float32, -bound_h, bound_h)

    encoder_outputs = jax.random.normal(k_enc, (L, H), jnp.float32)
    hidden0 = jnp.zeros((1, 1, H), jnp.float32)                     # initHidden()
    token = jax.random.randint(k_tok, (), 0, V, jnp.int32)

    # ---- f32-weight path: strict check against the plain-JAX reference ------
    params_f32 = init_attn_decoder_params(
        emb_table, w_attn, b_attn, w_combine, b_combine,
        w_ih, w_hh, b_ih, b_hh, w_out, b_out, weight_dtype=jnp.float32)
    out_f, hid_f, aw_f = attn_decoder_step(params_f32, token, hidden0, encoder_outputs)
    (out_f, hid_f, aw_f) = jax.block_until_ready((out_f, hid_f, aw_f))

    ref_out, ref_hid, ref_aw = _reference_forward(
        token, hidden0, encoder_outputs,
        emb_table, w_attn, b_attn, w_combine, b_combine,
        w_ih, w_hh, b_ih, b_hh, w_out, b_out)

    assert out_f.shape == (1, V)
    assert hid_f.shape == (1, 1, H)
    assert aw_f.shape == (L, 1)
    assert jnp.allclose(out_f, ref_out, atol=1e-4, rtol=1e-4)
    assert jnp.allclose(hid_f, ref_hid, atol=1e-4, rtol=1e-4)
    assert jnp.allclose(aw_f, ref_aw, atol=1e-5, rtol=1e-5)

    # ---- bf16-weight fast path: check against a reference that sees the -----
    # ---- same bf16-rounded weights (f32 accumulation everywhere) ------------
    params_bf16 = init_attn_decoder_params(
        emb_table, w_attn, b_attn, w_combine, b_combine,
        w_ih, w_hh, b_ih, b_hh, w_out, b_out, weight_dtype=jnp.bfloat16)
    out_b, hid_b, aw_b = attn_decoder_step(params_bf16, token, hidden0, encoder_outputs)
    (out_b, hid_b, aw_b) = jax.block_until_ready((out_b, hid_b, aw_b))

    def _q(x):
        return x.astype(jnp.bfloat16).astype(jnp.float32)

    ref_out_q, ref_hid_q, ref_aw_q = _reference_forward(
        token, hidden0, encoder_outputs,
        emb_table, w_attn, b_attn, _q(w_combine), b_combine,
        _q(w_ih), _q(w_hh), b_ih, b_hh, _q(w_out), b_out)

    assert jnp.allclose(out_b, ref_out_q, atol=1e-4, rtol=1e-4)
    assert jnp.allclose(hid_b, ref_hid_q, atol=1e-4, rtol=1e-4)
    assert jnp.allclose(aw_b, ref_aw_q, atol=1e-5, rtol=1e-5)

    print("KERNEL_OK")
</pallas_src>

<mosaic_0001>
module attributes {stable_mosaic.version = 11 : i64} {
  func.func @attn_decoder_kernel(%arg0: memref<8x512xf32, #tpu.memory_space<vmem>>, %arg1: memref<16x32xf32, #tpu.memory_space<vmem>>, %arg2: memref<64x32xf32, #tpu.memory_space<vmem>>, %arg3: memref<64x512xf32, #tpu.memory_space<vmem>>, %arg4: memref<32x128xf32, #tpu.memory_space<vmem>>, %arg5: memref<1x128xf32, #tpu.memory_space<vmem>>, %arg6: memref<1x128xf32, #tpu.memory_space<vmem>>, %arg7: memref<16x1xf32, #tpu.memory_space<vmem>>) attributes {dimension_semantics = [], scalar_prefetch = 0 : i64, scratch_operands = 0 : i64, tpu.core_type = #tpu.core_type<tc>} {
    %c0 = arith.constant 0 : index
    %c0_0 = arith.constant 0 : index
    %0 = vector.load %arg0[%c0, %c0_0] : memref<8x512xf32, #tpu.memory_space<vmem>>, vector<1x32xf32>
    %c1 = arith.constant 1 : index
    %c0_1 = arith.constant 0 : index
    %1 = vector.load %arg0[%c1, %c0_1] : memref<8x512xf32, #tpu.memory_space<vmem>>, vector<1x128xf32>
    %2 = vector.extract_strided_slice %1 {offsets = [0, 0], sizes = [1, 32], strides = [1, 1]} : vector<1x128xf32> to vector<1x32xf32>
    %c2 = arith.constant 2 : index
    %c0_2 = arith.constant 0 : index
    %3 = vector.load %arg0[%c2, %c0_2] : memref<8x512xf32, #tpu.memory_space<vmem>>, vector<1x32xf32>
    %c2_3 = arith.constant 2 : index
    %c32 = arith.constant 32 : index
    %4 = vector.load %arg0[%c2_3, %c32] : memref<8x512xf32, #tpu.memory_space<vmem>>, vector<1x1xf32>
    %c3 = arith.constant 3 : index
    %c0_4 = arith.constant 0 : index
    %5 = vector.load %arg0[%c3, %c0_4] : memref<8x512xf32, #tpu.memory_space<vmem>>, vector<1x32xf32>
    %c4 = arith.constant 4 : index
    %c0_5 = arith.constant 0 : index
    %6 = vector.load %arg0[%c4, %c0_5] : memref<8x512xf32, #tpu.memory_space<vmem>>, vector<1x32xf32>
    %c5 = arith.constant 5 : index
    %c0_6 = arith.constant 0 : index
    %7 = vector.load %arg0[%c5, %c0_6] : memref<8x512xf32, #tpu.memory_space<vmem>>, vector<1x128xf32>
    %c6 = arith.constant 6 : index
    %c0_7 = arith.constant 0 : index
    %8 = vector.load %arg0[%c6, %c0_7] : memref<8x512xf32, #tpu.memory_space<vmem>>, vector<1x512xf32>
    %c0_8 = arith.constant 0 : index
    %c0_9 = arith.constant 0 : index
    %9 = vector.load %arg1[%c0_8, %c0_9] : memref<16x32xf32, #tpu.memory_space<vmem>>, vector<16x32xf32>
    %10 = arith.mulf %2, %3 : vector<1x32xf32>
    %cst = arith.constant dense<0.000000e+00> : vector<1xf32>
    %11 = vector.multi_reduction <add>, %10, %cst [1] : vector<1x32xf32> to vector<1xf32>
    %12 = vector.shape_cast %11 : vector<1xf32> to vector<1x1xf32>
    %13 = arith.addf %12, %4 : vector<1x1xf32>
    %14 = vector.broadcast %5 : vector<1x32xf32> to vector<16x32xf32>
    %15 = arith.mulf %9, %14 : vector<16x32xf32>
    %cst_10 = arith.constant dense<0.000000e+00> : vector<16xf32>
    %16 = vector.multi_reduction <add>, %15, %cst_10 [1] : vector<16x32xf32> to vector<16xf32>
    %17 = vector.shape_cast %16 : vector<16xf32> to vector<16x1xf32>
    %18 = vector.broadcast %13 : vector<1x1xf32> to vector<16x1xf32>
    %19 = arith.addf %17, %18 : vector<16x1xf32>
    %20 = arith.subf %19, %19 : vector<16x1xf32>
    %21 = math.exp %20 : vector<16x1xf32>
    %c0_11 = arith.constant 0 : index
    %c0_12 = arith.constant 0 : index
    %22 = vector.load %arg7[%c0_11, %c0_12] : memref<16x1xf32, #tpu.memory_space<vmem>>, vector<16x1xf32>
    tpu.vector_store %arg7[%c0_11, %c0_12], %21 {strides = array<i32>} : memref<16x1xf32, #tpu.memory_space<vmem>>, vector<16x1xf32>,
    %23 = vector.broadcast %21 : vector<16x1xf32> to vector<16x32xf32>
    %24 = arith.mulf %23, %9 : vector<16x32xf32>
    %cst_13 = arith.constant dense<0.000000e+00> : vector<32xf32>
    %25 = vector.multi_reduction <add>, %24, %cst_13 [0] : vector<16x32xf32> to vector<32xf32>
    %26 = vector.shape_cast %25 : vector<32xf32> to vector<1x32xf32>
    %27 = tpu.concatenate %0, %26 in 1 : vector<1x32xf32>, vector<1x32xf32> -> vector<1x64xf32>
    %c0_14 = arith.constant 0 : index
    %c0_15 = arith.constant 0 : index
    %28 = vector.load %arg2[%c0_14, %c0_15] : memref<64x32xf32, #tpu.memory_space<vmem>>, vector<64x32xf32>
    %cst_16 = arith.constant dense<0.000000e+00> : vector<1x32xf32>
    %29 = tpu.matmul %27, %28, %cst_16 {dimension_numbers = #tpu.dot_dimension_numbers<[1], [0], [0], [1], [0, 0, 1, 1], [], []>} : vector<1x64xf32>, vector<64x32xf32>, vector<1x32xf32> -> vector<1x32xf32>
    %30 = arith.addf %29, %6 : vector<1x32xf32>
    %31 = tpu.concatenate %30, %2 in 1 : vector<1x32xf32>, vector<1x32xf32> -> vector<1x64xf32>
    %c0_17 = arith.constant 0 : index
    %c0_18 = arith.constant 0 : index
    %32 = vector.load %arg3[%c0_17, %c0_18] : memref<64x512xf32, #tpu.memory_space<vmem>>, vector<64x512xf32>
    %cst_19 = arith.constant dense<0.000000e+00> : vector<1x512xf32>
    %33 = tpu.matmul %31, %32, %cst_19 {dimension_numbers = #tpu.dot_dimension_numbers<[1], [0], [0], [1], [0, 0, 1, 1], [], []>} : vector<1x64xf32>, vector<64x512xf32>, vector<1x512xf32> -> vector<1x512xf32>
    %34 = arith.addf %33, %8 : vector<1x512xf32>
    %35 = vector.extract_strided_slice %34 {offsets = [0, 0], sizes = [1, 128], strides = [1, 1]} : vector<1x512xf32> to vector<1x128xf32>
    %36 = arith.negf %35 : vector<1x128xf32>
    %37 = math.exp %36 : vector<1x128xf32>
    %cst_20 = arith.constant 1.000000e+00 : f32
    %38 = vector.broadcast %cst_20 : f32 to vector<1x128xf32>
    %39 = arith.addf %38, %37 : vector<1x128xf32>
    %40 = arith.divf %38, %39 : vector<1x128xf32>
    %41 = vector.extract_strided_slice %34 {offsets = [0, 128], sizes = [1, 128], strides = [1, 1]} : vector<1x512xf32> to vector<1x128xf32>
    %42 = arith.negf %41 : vector<1x128xf32>
    %43 = math.exp %42 : vector<1x128xf32>
    %cst_21 = arith.constant 1.000000e+00 : f32
    %44 = vector.broadcast %cst_21 : f32 to vector<1x128xf32>
    %45 = arith.addf %44, %43 : vector<1x128xf32>
    %46 = arith.divf %44, %45 : vector<1x128xf32>
    %47 = vector.extract_strided_slice %34 {offsets = [0, 256], sizes = [1, 128], strides = [1, 1]} : vector<1x512xf32> to vector<1x128xf32>
    %48 = vector.extract_strided_slice %34 {offsets = [0, 384], sizes = [1, 128], strides = [1, 1]} : vector<1x512xf32> to vector<1x128xf32>
    %49 = arith.mulf %40, %48 : vector<1x128xf32>
    %50 = arith.addf %47, %49 : vector<1x128xf32>
    %51 = math.tanh %50 : vector<1x128xf32>
    %52 = arith.subf %1, %51 : vector<1x128xf32>
    %53 = arith.mulf %46, %52 : vector<1x128xf32>
    %54 = arith.addf %51, %53 : vector<1x128xf32>
    %c0_22 = arith.constant 0 : index
    %c0_23 = arith.constant 0 : index
    %55 = vector.load %arg6[%c0_22, %c0_23] : memref<1x128xf32, #tpu.memory_space<vmem>>, vector<1x128xf32>
    tpu.vector_store %arg6[%c0_22, %c0_23], %54 {strides = array<i32>} : memref<1x128xf32, #tpu.memory_space<vmem>>, vector<1x128xf32>,
    %56 = vector.extract_strided_slice %54 {offsets = [0, 0], sizes = [1, 32], strides = [1, 1]} : vector<1x128xf32> to vector<1x32xf32>
    %c0_24 = arith.constant 0 : index
    %c0_25 = arith.constant 0 : index
    %57 = vector.load %arg4[%c0_24, %c0_25] : memref<32x128xf32, #tpu.memory_space<vmem>>, vector<32x128xf32>
    %cst_26 = arith.constant dense<0.000000e+00> : vector<1x128xf32>
    %58 = tpu.matmul %56, %57, %cst_26 {dimension_numbers = #tpu.dot_dimension_numbers<[1], [0], [0], [1], [0, 0, 1, 1], [], []>} : vector<1x32xf32>, vector<32x128xf32>, vector<1x128xf32> -> vector<1x128xf32>
    %59 = arith.addf %58, %7 : vector<1x128xf32>
    %cst_27 = arith.constant dense<0xFF800000> : vector<1xf32>
    %60 = vector.multi_reduction <maximumf>, %59, %cst_27 [1] : vector<1x128xf32> to vector<1xf32>
    %61 = vector.shape_cast %60 : vector<1xf32> to vector<1x1xf32>
    %62 = vector.broadcast %61 : vector<1x1xf32> to vector<1x128xf32>
    %63 = arith.subf %59, %62 : vector<1x128xf32>
    %64 = math.exp %63 : vector<1x128xf32>
    %cst_28 = arith.constant dense<0.000000e+00> : vector<1xf32>
    %65 = vector.multi_reduction <add>, %64, %cst_28 [1] : vector<1x128xf32> to vector<1xf32>
    %66 = vector.shape_cast %65 : vector<1xf32> to vector<1x1xf32>
    %67 = math.log %66 : vector<1x1xf32>
    %68 = vector.broadcast %67 : vector<1x1xf32> to vector<1x128xf32>
    %69 = arith.subf %63, %68 : vector<1x128xf32>
    %c0_29 = arith.constant 0 : index
    %c0_30 = arith.constant 0 : index
    %70 = vector.load %arg5[%c0_29, %c0_30] : memref<1x128xf32, #tpu.memory_space<vmem>>, vector<1x128xf32>
    tpu.vector_store %arg5[%c0_29, %c0_30], %69 {strides = array<i32>} : memref<1x128xf32, #tpu.memory_space<vmem>>, vector<1x128xf32>,
    return
  }
}

</mosaic_0001>

<llo_original>
// kernel: attn_decoder_step.1
$region0: #{attn_decoder_step.1}
  #allocation0 [shape = 'u32[]', space=smem, size = 0x4, offset = 0x4, fixed_abs, tag = 'smem constant byte address 0x4 - core index']
  #allocation1 [shape = 'u32[144,128]{1,0:T(1,128)}', space=vmem, size = 0x12000, scoped, tag = 'internal scratch']
  %s0 = inlined_call_operand.vmem [shape: f32[8,512], index: 0, kind: input, shape index: {}]
  %s1 = inlined_call_operand.vmem [shape: f32[16,32], index: 1, kind: input, shape index: {}]
  %s2 = inlined_call_operand.vmem [shape: f32[64,32], index: 2, kind: input, shape index: {}]
  %s3 = inlined_call_operand.hbm [shape: f32[64,512], index: 3, kind: input, shape index: {}]
  %s4 = inlined_call_operand.vmem [shape: f32[32,128], index: 4, kind: input, shape index: {}]
  %s5 = inlined_call_operand.hbm [shape: f32[1,128], index: 5, kind: output, shape index: {0}]
  %s6 = inlined_call_operand.vmem [shape: f32[1,128], index: 6, kind: output, shape index: {1}]
  %s7 = inlined_call_operand.vmem [shape: f32[16,1], index: 7, kind: output, shape index: {2}]
  %8 = xla_tuple %s5, %s6, %s7
  %s9 = sld [smem:[#allocation0]]
  $region50: #{attn_decoder_step.1} parent=0
    _
  %s11 = ssub.s32 1, %s9
  %s12 = scalar_select 0, %s11, %s9
  $region1: #{attn_decoder_step.1} parent=0
    #allocation2 [shape = 'u8[131072]{0}', space=vmem, size = 0x20000, scoped, tag = 'input window, operand 3, single buffered']
    #allocation3 [shape = 's32[1]{0}', space=sflag, size = 0x4, scoped, tag = 'scoped memory for attn_decoder_step.1']
    #allocation4 [shape = 's32[1]{0}', space=sflag, size = 0x4, scoped, tag = 'scoped memory for attn_decoder_step.1']
    #allocation5 [shape = 'u8[512]{0}', space=vmem, size = 0x400, scoped, tag = 'output window, operand 0, single buffered']
    %13 = vsyncpa [#allocation3], 0
    %14 = vsyncpa [#allocation4], 0
    // Predicated region
    $region2: #{attn_decoder_step.1} parent=1 // pred_check
      _
    $region3: #{attn_decoder_step.1} parent=1 // pred_check_branch
      %16 = sbr.rel (0) target = $region5
    $region4: #{attn_decoder_step.1} parent=1 // pred_region
      _
    $region5: #{attn_decoder_step.1} parent=1 // pred_fallthru
      _
    // Predicated region
    $region6: #{attn_decoder_step.1} parent=1 // pred_check
      _
    $region7: #{attn_decoder_step.1} parent=1 // pred_check_branch
      %18 = sbr.rel (0) target = $region9
    $region8: #{attn_decoder_step.1} parent=1 // pred_region
      _
    $region9: #{attn_decoder_step.1} parent=1 // pred_fallthru
      _
    // Predicated region
    $region10: #{attn_decoder_step.1} parent=1 // pred_check
      _
    $region11: #{attn_decoder_step.1} parent=1 // pred_check_branch
      %20 = sbr.rel (0) target = $region13
    $region12: #{attn_decoder_step.1} parent=1 // pred_region
      _
    $region13: #{attn_decoder_step.1} parent=1 // pred_fallthru
      _
    // Predicated region
    $region14: #{attn_decoder_step.1} parent=1 // pred_check
      _
    $region15: #{attn_decoder_step.1} parent=1 // pred_check_branch
      %22 = sbr.rel (0) target = $region17
    $region16: #{attn_decoder_step.1} parent=1 // pred_region
      %s24 = ssub.s32 4096, 4096
      %25 = vsyncadd [#allocation3], %s24
      %s26 = sshll.u32 [#allocation2], 4
      %s27 = int_to_ptr.vmem [resolvable:$true] %s26
      %32 = dma.hbm_to_vmem [thread:$0]  %s3, 4096, %s27, [#allocation3], 512, 512, 32
    $region17: #{attn_decoder_step.1} parent=1 // pred_fallthru
      _
    // Predicated region
    $region18: #{attn_decoder_step.1} parent=1 // pred_check
      _
    $region19: #{attn_decoder_step.1} parent=1 // pred_check_branch
      %34 = sbr.rel (0) target = $region21
    $region20: #{attn_decoder_step.1} parent=1 // pred_region
      _
    $region21: #{attn_decoder_step.1} parent=1 // pred_fallthru
      _
    // Predicated region
    $region22: #{attn_decoder_step.1} parent=1 // pred_check
      _
    $region23: #{attn_decoder_step.1} parent=1 // pred_check_branch
      %36 = sbr.rel (0) target = $region25
    $region24: #{attn_decoder_step.1} parent=1 // pred_region
      %37 = dma.done [#allocation3], 4096
    $region25: #{attn_decoder_step.1} parent=1 // pred_fallthru
      _
    %v38 = vld [vmem:[%s0] ss:$0 sm:$0xff]
    %v39 = vld [vmem:[%s0 + $0x1] ss:$0 sm:$0xff]
    %v40 = vld [vmem:[%s0 + $0x2] ss:$0 sm:$0xff]
    %v41 = vld [vmem:[%s0 + $0x3] ss:$0 sm:$0xff]
    %v42 = vld [vmem:[%s0 + $0x4] ss:$0 sm:$0xff]
    %v43 = vld [vmem:[%s0 + $0x5] ss:$0 sm:$0xff]
    %s44 = scalar_lea.vmem %s0, 6
    %v45 = vld [vmem:[%s44] ss:$8 sm:$0xf]
    %v46 = vld [vmem:[%s1] sm:$0xff]
    %v47 = vld [vmem:[%s1 + $0x8] sm:$0xff]
    %v48 = vmul.f32 %v39, %v40
    %vm49 = vcmask 261120
    %v50 = vsel %vm49, %v48, 0.0
    %51 = vadd.xlane.f32.xlu0 %v50
    %v52 = vpop.xlane.xlu0 %51
    %v53 = vadd.f32 %v52, %v40
    %v54 = vmul.f32 %v46, %v41
    %v55 = vmul.f32 %v47, %v41
    %v56 = vsel %vm49, %v54, 0.0
    %57 = vadd.xlane.f32.xlu0 %v56
    %v58 = vpop.xlane.xlu0 %57
    %v59 = vsel %vm49, %v55, 0.0
    %60 = vadd.xlane.f32.xlu0 %v59
    %v61 = vpop.xlane.xlu0 %60
    %v62 = vadd.f32 %v58, %v53
    %v63 = vadd.f32 %v61, %v53
    %v64 = vsub.f32 %v62, %v62
    %v65 = vsub.f32 %v63, %v63
    %v66 = vmul.f32 %v64, 1.442695
    %v67 = vpow.pop %v66
    %v68 = vmul.f32 %v65, 1.442695
    %v69 = vpow.pop %v68
    %72 = vrot.lane.b32.xlu0 %v67, 96
    %v73 = vpop.permute.xlu0 %72
    %74 = vrot.lane.b32.xlu0 %v69, 96
    %v75 = vpop.permute.xlu0 %74
    %vm78 = vcmask 7168
    %79 = vst.msk [vmem:[%s7] sm:$0xff] %vm78, %v73
    %80 = vst.msk [vmem:[%s7 + $0x8] sm:$0xff] %vm78, %v75
    %81 = vset.pattern.permute.xlu0 32
    %82 = vperm.xlu0 %81, %v67
    %v83 = vpop.permute.xlu0 %82
    %85 = vset.pattern.permute.xlu0 32
    %86 = vperm.xlu0 %85, %v69
    %v87 = vpop.permute.xlu0 %86
    %v89 = vmul.f32 %v83, %v46
    %v90 = vmul.f32 %v87, %v47
    %v91 = vsel %vm49, %v89, 0.0
    %v92 = vsel %vm49, %v90, 0.0
    %v93 = vadd.f32 %v91, %v92
    %v94 = vrot.slane %v93, 4
    %v95 = vadd.f32 %v93, %v94
    %v96 = vrot.slane %v95, 2
    %v97 = vadd.f32 %v95, %v96
    %v98 = vrot.slane %v97, 1
    %v99 = vadd.f32 %v97, %v98
    %101 = vrot.lane.b32.xlu0 %v99, 32
    %v102 = vpop.permute.xlu0 %101
    %v104 = vsel %vm49, %v38, %v102
    %v105 = vld [vmem:[%s2] sm:$0xff]
    %v106 = vld [vmem:[%s2 + $0x8] sm:$0xff]
    %v107 = vld [vmem:[%s2 + $0x10] sm:$0xff]
    %v108 = vld [vmem:[%s2 + $0x18] sm:$0xff]
    %v109 = vld [vmem:[%s2 + $0x20] sm:$0xff]
    %v110 = vld [vmem:[%s2 + $0x28] sm:$0xff]
    %v111 = vld [vmem:[%s2 + $0x30] sm:$0xff]
    %v112 = vld [vmem:[%s2 + $0x38] sm:$0xff]
    %vm113 = vcmask 523264
    %v115 = vsel %vm113, %v104, 0
    %117 = vmatprep.subr.mxu0 0.0
    %118 = vmatpush1.msra.mxu0 %v105
    %119 = vmatprep.subr.mxu0 0.0
    %120 = vmatpush1.msra.mxu0 %v106
    %121 = vmatprep.subr.mxu0 0.0
    %122 = vmatpush1.msra.mxu0 %v107
    %123 = vmatprep.subr.mxu0 0.0
    %124 = vmatpush1.msra.mxu0 %v108
    %125 = vmatprep.subr.mxu0 0.0
    %126 = vmatpush1.msra.mxu0 %v109
    %127 = vmatprep.subr.mxu0 0.0
    %128 = vmatpush1.msra.mxu0 %v110
    %129 = vmatprep.subr.mxu0 0.0
    %130 = vmatpush1.msra.mxu0 %v111
    %131 = vmatprep.subr.mxu0 0.0
    %132 = vmatpush1.msra.mxu0 %v112
    %133 = vmatprep.subr.mxu0 0.0
    %134 = vmatpush1.msra.mxu0 0.0
    %135 = vmatprep.subr.mxu0 0.0
    %136 = vmatpush1.msra.mxu0 0.0
    %137 = vmatprep.subr.mxu0 0.0
    %138 = vmatpush1.msra.mxu0 0.0
    %139 = vmatprep.subr.mxu0 0.0
    %140 = vmatpush1.msra.mxu0 0.0
    %141 = vmatprep.subr.mxu0 0.0
    %142 = vmatpush1.msra.mxu0 0.0
    %143 = vmatprep.subr.mxu0 0.0
    %144 = vmatpush1.msra.mxu0 0.0
    %145 = vmatprep.subr.mxu0 0.0
    %146 = vmatpush1.msra.mxu0 0.0
    %147 = vmatprep.subr.mxu0 0.0
    %148 = vmatpush1.msra.mxu0 0.0
    %149 = vmatprep.subr.mxu0 0.0
    %150 = vmatpush1.msra.mxu0 0.0
    %151 = vmatprep.subr.mxu0 0.0
    %152 = vmatpush1.msra.mxu0 0.0
    %153 = vmatprep.subr.mxu0 0.0
    %154 = vmatpush1.msra.mxu0 0.0
    %155 = vmatprep.subr.mxu0 0.0
    %156 = vmatpush1.msra.mxu0 0.0
    %157 = vmatprep.subr.mxu0 0.0
    %158 = vmatpush1.msra.mxu0 0.0
    %159 = vmatprep.subr.mxu0 0.0
    %160 = vmatpush1.msra.mxu0 0.0
    %161 = vmatprep.subr.mxu0 0.0
    %162 = vmatpush1.msra.mxu0 0.0
    %163 = vmatprep.subr.mxu0 0.0
    %164 = vmatpush1.msra.mxu0 0.0
    %165 = vmatprep.subr.mxu0 0.0
    %166 = vmatpush1.msra.mxu0 0.0
    %167 = vmatprep.subr.mxu0 0.0
    %168 = vmatpush1.msra.mxu0 0.0
    %169 = vmatprep.subr.mxu0 0.0
    %170 = vmatpush1.msra.mxu0 0.0
    %171 = vmatprep.subr.mxu0 0.0
    %172 = vmatpush1.msra.mxu0 0.0
    %173 = vmatprep.subr.mxu0 0.0
    %174 = vmatpush1.msra.mxu0 0.0
    %175 = vmatprep.subr.mxu0 0.0
    %176 = vmatpush1.msra.mxu0 0.0
    %177 = vmatprep.subr.mxu0 0.0
    %178 = vmatpush1.msra.mxu0 0.0
    %179 = vmatprep.subr.mxu0 0.0
    %180 = vmatpush1.msra.mxu0 0.0
    %181 = vmatprep.mubr.f32.mxu0 0.0
    %182 = vmatmul.mubr.f32.gmra.mrb[0].mxu0 %v115
    %v183 = vpop.f32.mrb[0].mxu0
    %v184 = vadd.f32 %v42, %v183
    %v185 = vpop.f32.mrb[0].mxu0
    %186 = vdwg.mxu0
    %188 = vrot.lane.b32.xlu0 %v39, 32
    %v189 = vpop.permute.xlu0 %188
    %v191 = vsel %vm49, %v184, %v189
    %v192 = vld [vmem:[#allocation2] sm:$0xff]
    %v193 = vld [vmem:[#allocation2 + $0x8] sm:$0xff]
    %v194 = vld [vmem:[#allocation2 + $0x10] sm:$0xff]
    %v195 = vld [vmem:[#allocation2 + $0x18] sm:$0xff]
    %v196 = vld [vmem:[#allocation2 + $0x20] sm:$0xff]
    %v197 = vld [vmem:[#allocation2 + $0x28] sm:$0xff]
    %v198 = vld [vmem:[#allocation2 + $0x30] sm:$0xff]
    %v199 = vld [vmem:[#allocation2 + $0x38] sm:$0xff]
    %v200 = vld [vmem:[#allocation2 + $0x40] sm:$0xff]
    %v201 = vld [vmem:[#allocation2 + $0x48] sm:$0xff]
    %v202 = vld [vmem:[#allocation2 + $0x50] sm:$0xff]
    %v203 = vld [vmem:[#allocation2 + $0x58] sm:$0xff]
    %v204 = vld [vmem:[#allocation2 + $0x60] sm:$0xff]
    %v205 = vld [vmem:[#allocation2 + $0x68] sm:$0xff]
    %v206 = vld [vmem:[#allocation2 + $0x70] sm:$0xff]
    %v207 = vld [vmem:[#allocation2 + $0x78] sm:$0xff]
    %v208 = vld [vmem:[#allocation2 + $0x80] sm:$0xff]
    %v209 = vld [vmem:[#allocation2 + $0x88] sm:$0xff]
    %v210 = vld [vmem:[#allocation2 + $0x90] sm:$0xff]
    %v211 = vld [vmem:[#allocation2 + $0x98] sm:$0xff]
    %v212 = vld [vmem:[#allocation2 + $0xa0] sm:$0xff]
    %v213 = vld [vmem:[#allocation2 + $0xa8] sm:$0xff]
    %v214 = vld [vmem:[#allocation2 + $0xb0] sm:$0xff]
    %v215 = vld [vmem:[#allocation2 + $0xb8] sm:$0xff]
    %v216 = vld [vmem:[#allocation2 + $0xc0] sm:$0xff]
    %v217 = vld [vmem:[#allocation2 + $0xc8] sm:$0xff]
    %v218 = vld [vmem:[#allocation2 + $0xd0] sm:$0xff]
    %v219 = vld [vmem:[#allocation2 + $0xd8] sm:$0xff]
    %v220 = vld [vmem:[#allocation2 + $0xe0] sm:$0xff]
    %v221 = vld [vmem:[#allocation2 + $0xe8] sm:$0xff]
    %v222 = vld [vmem:[#allocation2 + $0xf0] sm:$0xff]
    %v223 = vld [vmem:[#allocation2 + $0xf8] sm:$0xff]
    %v225 = vlaneseq
    %v226 = vshrl.u32 %v225, 7
    %v227 = vsub.s32 0, %v226
    %v228 = vrot.slane %v45, %v227
    %v229 = vlaneseq
    %v230 = vshrl.u32 %v229, 7
    %v231 = vsub.s32 1, %v230
    %v232 = vrot.slane %v45, %v231
    %v233 = vlaneseq
    %v234 = vshrl.u32 %v233, 7
    %v235 = vsub.s32 2, %v234
    %v236 = vrot.slane %v45, %v235
    %v237 = vlaneseq
    %v238 = vshrl.u32 %v237, 7
    %v239 = vsub.s32 3, %v238
    %v240 = vrot.slane %v45, %v239
    %v246 = vsel %vm113, %v191, 0
    %248 = vmatprep.subr.mxu0 %v193
    %249 = vmatpush1.msra.mxu0 %v192
    %250 = vmatprep.subr.mxu0 %v197
    %251 = vmatpush1.msra.mxu0 %v196
    %252 = vmatprep.subr.mxu0 %v201
    %253 = vmatpush1.msra.mxu0 %v200
    %254 = vmatprep.subr.mxu0 %v205
    %255 = vmatpush1.msra.mxu0 %v204
    %256 = vmatprep.subr.mxu0 %v209
    %257 = vmatpush1.msra.mxu0 %v208
    %258 = vmatprep.subr.mxu0 %v213
    %259 = vmatpush1.msra.mxu0 %v212
    %260 = vmatprep.subr.mxu0 %v217
    %261 = vmatpush1.msra.mxu0 %v216
    %262 = vmatprep.subr.mxu0 %v221
    %263 = vmatpush1.msra.mxu0 %v220
    %264 = vmatprep.subr.mxu0 0.0
    %265 = vmatpush1.msra.mxu0 0.0
    %266 = vmatprep.subr.mxu0 0.0
    %267 = vmatpush1.msra.mxu0 0.0
    %268 = vmatprep.subr.mxu0 0.0
    %269 = vmatpush1.msra.mxu0 0.0
    %270 = vmatprep.subr.mxu0 0.0
    %271 = vmatpush1.msra.mxu0 0.0
    %272 = vmatprep.subr.mxu0 0.0
    %273 = vmatpush1.msra.mxu0 0.0
    %274 = vmatprep.subr.mxu0 0.0
    %275 = vmatpush1.msra.mxu0 0.0
    %276 = vmatprep.subr.mxu0 0.0
    %277 = vmatpush1.msra.mxu0 0.0
    %278 = vmatprep.subr.mxu0 0.0
    %279 = vmatpush1.msra.mxu0 0.0
    %280 = vmatprep.subr.mxu0 0.0
    %281 = vmatpush1.msra.mxu0 0.0
    %282 = vmatprep.subr.mxu0 0.0
    %283 = vmatpush1.msra.mxu0 0.0
    %284 = vmatprep.subr.mxu0 0.0
    %285 = vmatpush1.msra.mxu0 0.0
    %286 = vmatprep.subr.mxu0 0.0
    %287 = vmatpush1.msra.mxu0 0.0
    %288 = vmatprep.subr.mxu0 0.0
    %289 = vmatpush1.msra.mxu0 0.0
    %290 = vmatprep.subr.mxu0 0.0
    %291 = vmatpush1.msra.mxu0 0.0
    %292 = vmatprep.subr.mxu0 0.0
    %293 = vmatpush1.msra.mxu0 0.0
    %294 = vmatprep.subr.mxu0 0.0
    %295 = vmatpush1.msra.mxu0 0.0
    %296 = vmatprep.subr.mxu0 0.0
    %297 = vmatpush1.msra.mxu0 0.0
    %298 = vmatprep.subr.mxu0 0.0
    %299 = vmatpush1.msra.mxu0 0.0
    %300 = vmatprep.subr.mxu0 0.0
    %301 = vmatpush1.msra.mxu0 0.0
    %302 = vmatprep.subr.mxu0 0.0
    %303 = vmatpush1.msra.mxu0 0.0
    %304 = vmatprep.subr.mxu0 0.0
    %305 = vmatpush1.msra.mxu0 0.0
    %306 = vmatprep.subr.mxu0 0.0
    %307 = vmatpush1.msra.mxu0 0.0
    %308 = vmatprep.subr.mxu0 0.0
    %309 = vmatpush1.msra.mxu0 0.0
    %310 = vmatprep.subr.mxu0 0.0
    %311 = vmatpush1.msra.mxu0 0.0
    %312 = vmatprep.mubr.f32.mxu0 0.0
    %313 = vmatmul.mubr.f32.gmra.mrb[0].mxu0 %v246
    %v314 = vpop.f32.mrb[0].mxu0
    %v315 = vadd.f32 %v228, %v314
    %v316 = vpop.f32.mrb[0].mxu0
    %v317 = vadd.f32 %v232, %v316
    %318 = vdwg.mxu0
    %319 = vmatprep.subr.mxu0 %v195
    %320 = vmatpush1.msra.mxu0 %v194
    %321 = vmatprep.subr.mxu0 %v199
    %322 = vmatpush1.msra.mxu0 %v198
    %323 = vmatprep.subr.mxu0 %v203
    %324 = vmatpush1.msra.mxu0 %v202
    %325 = vmatprep.subr.mxu0 %v207
    %326 = vmatpush1.msra.mxu0 %v206
    %327 = vmatprep.subr.mxu0 %v211
    %328 = vmatpush1.msra.mxu0 %v210
    %329 = vmatprep.subr.mxu0 %v215
    %330 = vmatpush1.msra.mxu0 %v214
    %331 = vmatprep.subr.mxu0 %v219
    %332 = vmatpush1.msra.mxu0 %v218
    %333 = vmatprep.subr.mxu0 %v223
    %334 = vmatpush1.msra.mxu0 %v222
    %335 = vmatprep.subr.mxu0 0.0
    %336 = vmatpush1.msra.mxu0 0.0
    %337 = vmatprep.subr.mxu0 0.0
    %338 = vmatpush1.msra.mxu0 0.0
    %339 = vmatprep.subr.mxu0 0.0
    %340 = vmatpush1.msra.mxu0 0.0
    %341 = vmatprep.subr.mxu0 0.0
    %342 = vmatpush1.msra.mxu0 0.0
    %343 = vmatprep.subr.mxu0 0.0
    %344 = vmatpush1.msra.mxu0 0.0
    %345 = vmatprep.subr.mxu0 0.0
    %346 = vmatpush1.msra.mxu0 0.0
    %347 = vmatprep.subr.mxu0 0.0
    %348 = vmatpush1.msra.mxu0 0.0
    %349 = vmatprep.subr.mxu0 0.0
    %350 = vmatpush1.msra.mxu0 0.0
    %351 = vmatprep.subr.mxu0 0.0
    %352 = vmatpush1.msra.mxu0 0.0
    %353 = vmatprep.subr.mxu0 0.0
    %354 = vmatpush1.msra.mxu0 0.0
    %355 = vmatprep.subr.mxu0 0.0
    %356 = vmatpush1.msra.mxu0 0.0
    %357 = vmatprep.subr.mxu0 0.0
    %358 = vmatpush1.msra.mxu0 0.0
    %359 = vmatprep.subr.mxu0 0.0
    %360 = vmatpush1.msra.mxu0 0.0
    %361 = vmatprep.subr.mxu0 0.0
    %362 = vmatpush1.msra.mxu0 0.0
    %363 = vmatprep.subr.mxu0 0.0
    %364 = vmatpush1.msra.mxu0 0.0
    %365 = vmatprep.subr.mxu0 0.0
    %366 = vmatpush1.msra.mxu0 0.0
    %367 = vmatprep.subr.mxu0 0.0
    %368 = vmatpush1.msra.mxu0 0.0
    %369 = vmatprep.subr.mxu0 0.0
    %370 = vmatpush1.msra.mxu0 0.0
    %371 = vmatprep.subr.mxu0 0.0
    %372 = vmatpush1.msra.mxu0 0.0
    %373 = vmatprep.subr.mxu0 0.0
    %374 = vmatpush1.msra.mxu0 0.0
    %375 = vmatprep.subr.mxu0 0.0
    %376 = vmatpush1.msra.mxu0 0.0
    %377 = vmatprep.subr.mxu0 0.0
    %378 = vmatpush1.msra.mxu0 0.0
    %379 = vmatprep.subr.mxu0 0.0
    %380 = vmatpush1.msra.mxu0 0.0
    %381 = vmatprep.subr.mxu0 0.0
    %382 = vmatpush1.msra.mxu0 0.0
    %383 = vmatprep.mubr.f32.mxu0 0.0
    %384 = vmatmul.mubr.f32.gmra.mrb[0].mxu0 %v246
    %v385 = vpop.f32.mrb[0].mxu0
    %v386 = vadd.f32 %v236, %v385
    %v387 = vpop.f32.mrb[0].mxu0
    %v388 = vadd.f32 %v240, %v387
    %389 = vdwg.mxu0
    %v390 = vxor.u32 %v315, 2147483648
    %v391 = vmul.f32 %v390, 1.442695
    %v392 = vpow.pop %v391
    %v393 = vadd.f32 %v392, 1.0
    %v394 = vrcp.pop %v393
    %v395 = vmul.f32 1.0, %v394
    %v396 = vxor.u32 %v317, 2147483648
    %v397 = vmul.f32 %v396, 1.442695
    %v398 = vpow.pop %v397
    %v399 = vadd.f32 %v398, 1.0
    %v400 = vrcp.pop %v399
    %v401 = vmul.f32 1.0, %v400
    %v402 = vmul.f32 %v395, %v388
    %v403 = vadd.f32 %v386, %v402
    %v404 = vtanh.pop %v403
    %v405 = vsub.f32 %v39, %v404
    %v406 = vmul.f32 %v401, %v405
    %v407 = vadd.f32 %v404, %v406
    %408 = vst [vmem:[%s6] sm:$0x1] %v407
    %v409 = vld [vmem:[%s4] sm:$0xff]
    %v410 = vld [vmem:[%s4 + $0x8] sm:$0xff]
    %v411 = vld [vmem:[%s4 + $0x10] sm:$0xff]
    %v412 = vld [vmem:[%s4 + $0x18] sm:$0xff]
    %v414 = vsel %vm49, %v407, 0
    %416 = vmatprep.subr.mxu0 0.0
    %417 = vmatpush1.msra.mxu0 %v409
    %418 = vmatprep.subr.mxu0 0.0
    %419 = vmatpush1.msra.mxu0 %v410
    %420 = vmatprep.subr.mxu0 0.0
    %421 = vmatpush1.msra.mxu0 %v411
    %422 = vmatprep.subr.mxu0 0.0
    %423 = vmatpush1.msra.mxu0 %v412
    %424 = vmatprep.subr.mxu0 0.0
    %425 = vmatpush1.msra.mxu0 0.0
    %426 = vmatprep.subr.mxu0 0.0
    %427 = vmatpush1.msra.mxu0 0.0
    %428 = vmatprep.subr.mxu0 0.0
    %429 = vmatpush1.msra.mxu0 0.0
    %430 = vmatprep.subr.mxu0 0.0
    %431 = vmatpush1.msra.mxu0 0.0
    %432 = vmatprep.subr.mxu0 0.0
    %433 = vmatpush1.msra.mxu0 0.0
    %434 = vmatprep.subr.mxu0 0.0
    %435 = vmatpush1.msra.mxu0 0.0
    %436 = vmatprep.subr.mxu0 0.0
    %437 = vmatpush1.msra.mxu0 0.0
    %438 = vmatprep.subr.mxu0 0.0
    %439 = vmatpush1.msra.mxu0 0.0
    %440 = vmatprep.subr.mxu0 0.0
    %441 = vmatpush1.msra.mxu0 0.0
    %442 = vmatprep.subr.mxu0 0.0
    %443 = vmatpush1.msra.mxu0 0.0
    %444 = vmatprep.subr.mxu0 0.0
    %445 = vmatpush1.msra.mxu0 0.0
    %446 = vmatprep.subr.mxu0 0.0
    %447 = vmatpush1.msra.mxu0 0.0
    %448 = vmatprep.subr.mxu0 0.0
    %449 = vmatpush1.msra.mxu0 0.0
    %450 = vmatprep.subr.mxu0 0.0
    %451 = vmatpush1.msra.mxu0 0.0
    %452 = vmatprep.subr.mxu0 0.0
    %453 = vmatpush1.msra.mxu0 0.0
    %454 = vmatprep.subr.mxu0 0.0
    %455 = vmatpush1.msra.mxu0 0.0
    %456 = vmatprep.subr.mxu0 0.0
    %457 = vmatpush1.msra.mxu0 0.0
    %458 = vmatprep.subr.mxu0 0.0
    %459 = vmatpush1.msra.mxu0 0.0
    %460 = vmatprep.subr.mxu0 0.0
    %461 = vmatpush1.msra.mxu0 0.0
    %462 = vmatprep.subr.mxu0 0.0
    %463 = vmatpush1.msra.mxu0 0.0
    %464 = vmatprep.subr.mxu0 0.0
    %465 = vmatpush1.msra.mxu0 0.0
    %466 = vmatprep.subr.mxu0 0.0
    %467 = vmatpush1.msra.mxu0 0.0
    %468 = vmatprep.subr.mxu0 0.0
    %469 = vmatpush1.msra.mxu0 0.0
    %470 = vmatprep.subr.mxu0 0.0
    %471 = vmatpush1.msra.mxu0 0.0
    %472 = vmatprep.subr.mxu0 0.0
    %473 = vmatpush1.msra.mxu0 0.0
    %474 = vmatprep.subr.mxu0 0.0
    %475 = vmatpush1.msra.mxu0 0.0
    %476 = vmatprep.subr.mxu0 0.0
    %477 = vmatpush1.msra.mxu0 0.0
    %478 = vmatprep.subr.mxu0 0.0
    %479 = vmatpush1.msra.mxu0 0.0
    %480 = vmatprep.mubr.f32.mxu0 0.0
    %481 = vmatmul.mubr.f32.gmra.mrb[0].mxu0 %v414
    %v482 = vpop.f32.mrb[0].mxu0
    %v483 = vadd.f32 %v43, %v482
    %v484 = vpop.f32.mrb[0].mxu0
    %485 = vdwg.mxu0
    %vm486 = vcmask 1040384
    %v487 = vsel %vm486, %v483, -inf
    %488 = vmax.xlane.f32.xlu0 %v487
    %v489 = vpop.xlane.xlu0 %488
    %v490 = vsub.f32 %v483, %v489
    %v491 = vmul.f32 %v490, 1.442695
    %v492 = vpow.pop %v491
    %v493 = vsel %vm486, %v492, 0.0
    %494 = vadd.xlane.f32.xlu0 %v493
    %v495 = vpop.xlane.xlu0 %494
    %v496 = vlog2.pop %v495
    %v497 = vmul.f32 %v496, 0.6931472
    %v498 = vsub.f32 %v490, %v497
    %499 = vst [vmem:[#allocation5] sm:$0x1] %v498
    // Predicated region
    $region26: #{attn_decoder_step.1} parent=1 // pred_check
      _
    $region27: #{attn_decoder_step.1} parent=1 // pred_check_branch
      %501 = sbr.rel (0) target = $region29
    $region28: #{attn_decoder_step.1} parent=1 // pred_region
      %s503 = ssub.s32 16, 16
      %504 = vsyncadd [#allocation4], %s503
      %s506 = sshll.u32 [#allocation5], 4
      %s507 = int_to_ptr.vmem [resolvable:$true] %s506
      %509 = dma.vmem_to_hbm [thread:$0]  %s507, 16, %s5, [#allocation4]
    $region29: #{attn_decoder_step.1} parent=1 // pred_fallthru
      _
    // Predicated region
    $region30: #{attn_decoder_step.1} parent=1 // pred_check
      _
    $region31: #{attn_decoder_step.1} parent=1 // pred_check_branch
      %511 = sbr.rel (0) target = $region33
    $region32: #{attn_decoder_step.1} parent=1 // pred_region
      _
    $region33: #{attn_decoder_step.1} parent=1 // pred_fallthru
      _
    // Predicated region
    $region34: #{attn_decoder_step.1} parent=1 // pred_check
      _
    $region35: #{attn_decoder_step.1} parent=1 // pred_check_branch
      %513 = sbr.rel (0) target = $region37
    $region36: #{attn_decoder_step.1} parent=1 // pred_region
      _
    $region37: #{attn_decoder_step.1} parent=1 // pred_fallthru
      _
    // Predicated region
    $region38: #{attn_decoder_step.1} parent=1 // pred_check
      _
    $region39: #{attn_decoder_step.1} parent=1 // pred_check_branch
      %515 = sbr.rel (0) target = $region41
    $region40: #{attn_decoder_step.1} parent=1 // pred_region
      %516 = dma.done [#allocation4], 16
    $region41: #{attn_decoder_step.1} parent=1 // pred_fallthru
      _
    // Predicated region
    $region42: #{attn_decoder_step.1} parent=1 // pred_check
      _
    $region43: #{attn_decoder_step.1} parent=1 // pred_check_branch
      %518 = sbr.rel (0) target = $region45
    $region44: #{attn_decoder_step.1} parent=1 // pred_region
      _
    $region45: #{attn_decoder_step.1} parent=1 // pred_fallthru
      _
    // Predicated region
    $region46: #{attn_decoder_step.1} parent=1 // pred_check
      _
    $region47: #{attn_decoder_step.1} parent=1 // pred_check_branch
      %520 = sbr.rel (0) target = $region49
    $region48: #{attn_decoder_step.1} parent=1 // pred_region
      _
    $region49: #{attn_decoder_step.1} parent=1 // pred_fallthru
      _
    %521 = vsyncpa [#allocation3], 1
    %522 = vsyncpa [#allocation4], 1

</llo_original>
